<compile_context>
chip_gen: v6e
topology: v6e:2x2x1
jax: 0.10.0
libtpu: 0.0.40
codegen_flags: <defaults>
</compile_context>

<pallas_src>
import functools

import jax
import jax.numpy as jnp
from jax.experimental import pallas as pl
from jax.experimental.pallas import tpu as pltpu


def _round_up(x, m):
    return (x + m - 1) // m * m


# ----------------------------------------------------------------------------
# Kernel
# ----------------------------------------------------------------------------
def _vae_fwd_kernel(x_ref, eps_ref,
                    w1_ref, b1_ref,
                    w2_ref, b2_ref,
                    w3_ref, b3_ref,
                    out_ref, *, latent_dim, out_pad, matmul_dtype):
    """One batch tile: encoder matmuls + fused mu/logvar head + reparameterize.

    out_ref tile layout (lane-dense, padded to a multiple of 128):
        [:, 0:L]      z
        [:, L:3L]     [mu | logvar]
        [:, 3L:]      zero padding
    """
    def mm(a, w_ref):
        # MXU matmul with f32 accumulation; inputs optionally narrowed to bf16.
        return jnp.dot(a.astype(matmul_dtype), w_ref[...],
                       preferred_element_type=jnp.float32)

    x = x_ref[...]
    # Encoder: h1 = relu(x @ W1 + b1); h2 = relu(h1 @ W2 + b2)  (f32 elementwise)
    h1 = jnp.maximum(mm(x, w1_ref) + b1_ref[...], 0.0)
    h2 = jnp.maximum(mm(h1, w2_ref) + b2_ref[...], 0.0)

    # Fused heads: one matmul producing [mu | logvar] of width 2*latent_dim.
    muv = mm(h2, w3_ref) + b3_ref[...]
    mu = muv[:, :latent_dim]
    logvar = muv[:, latent_dim:]

    # Reparameterize (var_scale = 1.0): z = mu + eps * exp(0.5 * logvar)  (f32)
    z = mu + eps_ref[...] * jnp.exp(0.5 * logvar)

    # Direct sliced stores into the lane-dense output slab (no concat copy).
    out_ref[:, :latent_dim] = z
    out_ref[:, latent_dim:3 * latent_dim] = muv
    if out_pad:
        out_ref[:, 3 * latent_dim:] = jnp.zeros((z.shape[0], out_pad),
                                                out_ref.dtype)


# ----------------------------------------------------------------------------
# One-time parameter preparation (PyTorch layout -> kernel layout)
# ----------------------------------------------------------------------------
def prepare_params(params, matmul_dtype=jnp.float32):
    """Convert PyTorch layout (w: [out,in], b: [out]) to kernel layout:
    weights [in, out] (optionally bf16) with hidden widths zero-padded to
    multiples of 128 lanes, biases [1, out_padded] (f32), and the mu/logvar
    heads fused into a single w3/b3.  Zero pads preserve the math exactly."""
    w1 = jnp.asarray(params["w1"], jnp.float32).T          # [in,  h1]
    w2 = jnp.asarray(params["w2"], jnp.float32).T          # [h1,  h2]
    w31 = jnp.asarray(params["w31"], jnp.float32).T        # [h2,  L]
    w32 = jnp.asarray(params["w32"], jnp.float32).T        # [h2,  L]
    b1 = jnp.asarray(params["b1"], jnp.float32)
    b2 = jnp.asarray(params["b2"], jnp.float32)
    b3 = jnp.concatenate([jnp.asarray(params["b31"], jnp.float32),
                          jnp.asarray(params["b32"], jnp.float32)])

    h1, h2 = w1.shape[1], w2.shape[1]
    h1p, h2p = _round_up(h1, 128), _round_up(h2, 128)

    w1p = jnp.pad(w1, ((0, 0), (0, h1p - h1)))
    b1p = jnp.pad(b1, (0, h1p - h1)).reshape(1, -1)
    w2p = jnp.pad(w2, ((0, h1p - h1), (0, h2p - h2)))
    b2p = jnp.pad(b2, (0, h2p - h2)).reshape(1, -1)
    w3 = jnp.pad(jnp.concatenate([w31, w32], axis=1), ((0, h2p - h2), (0, 0)))

    return {
        "w1": w1p.astype(matmul_dtype), "b1": b1p,
        "w2": w2p.astype(matmul_dtype), "b2": b2p,
        "w3": w3.astype(matmul_dtype), "b3": b3.reshape(1, -1),
    }


# ----------------------------------------------------------------------------
# Forward wrapper
# ----------------------------------------------------------------------------
def _pick_batch_tile(B, block_b, row_bytes):
    """Pick the batch tile: big (fewer grid steps / more HBM BW), but
    >=2 grid steps when B > 8 (v7x 2-TC sharding + DMA pipelining) and capped
    so double-buffered streams stay well under v7x's 64 MiB VMEM."""
    stream_budget = 28 * 1024 * 1024                      # 2x(x+eps+out) cap
    max_tb = max(8, (stream_budget // (2 * row_bytes)) // 8 * 8)
    if B <= 8:
        return 8
    tb = min(block_b, max_tb, _round_up(pl.cdiv(B, 2), 8))
    return max(8, tb)


def vae_forward(x, eps, kp, *, block_b=4096):
    """x: [B, input_dim], eps: [B, latent_dim] standard-normal noise.
    kp: output of prepare_params().  Returns (z, mu, logvar), f32 [B, latent]."""
    B, input_dim = x.shape
    latent_dim = eps.shape[1]
    matmul_dtype = kp["w1"].dtype
    dsize = jnp.dtype(matmul_dtype).itemsize

    out_used = 3 * latent_dim
    out_w = _round_up(out_used, 128)                      # lane-dense output
    out_pad = out_w - out_used

    row_bytes = input_dim * dsize + latent_dim * 4 + out_w * 4
    tb = _pick_batch_tile(B, block_b, row_bytes)

    # Zero-pad the batch to a multiple of tb: no garbage rows reach exp(),
    # so discarded rows stay finite (NaN-trap safe).  Valid rows are unchanged.
    Bp = _round_up(B, tb)
    xk = x.astype(matmul_dtype)
    epsk = eps.astype(jnp.float32)
    if Bp != B:
        xk = jnp.pad(xk, ((0, Bp - B), (0, 0)))
        epsk = jnp.pad(epsk, ((0, Bp - B), (0, 0)))
    grid = (Bp // tb,)

    def row_spec(d):
        return pl.BlockSpec((tb, d), lambda i: (i, 0))

    def const_spec(shape):
        return pl.BlockSpec(shape, lambda i: (0, 0))      # VMEM-resident weights

    kernel = functools.partial(
        _vae_fwd_kernel,
        latent_dim=latent_dim, out_pad=out_pad, matmul_dtype=matmul_dtype)

    h1p = kp["w1"].shape[1]
    h2p = kp["w2"].shape[1]
    weight_bytes = sum(int(v.size) * v.dtype.itemsize for v in kp.values())
    cost = pl.CostEstimate(
        flops=2 * Bp * (input_dim * h1p + h1p * h2p + h2p * 2 * latent_dim),
        transcendentals=Bp * latent_dim,
        bytes_accessed=Bp * row_bytes + weight_bytes)

    # Actual VMEM need (+ margin), instead of a blanket 48 MiB grab.
    vmem_limit = int(min(2 * tb * row_bytes + weight_bytes + (4 << 20), 64 << 20))

    packed = pl.pallas_call(
        kernel,
        out_shape=jax.ShapeDtypeStruct((Bp, out_w), jnp.float32),
        grid=grid,
        in_specs=[
            row_spec(input_dim),                          # x
            row_spec(latent_dim),                         # eps
            const_spec(kp["w1"].shape), const_spec(kp["b1"].shape),
            const_spec(kp["w2"].shape), const_spec(kp["b2"].shape),
            const_spec(kp["w3"].shape), const_spec(kp["b3"].shape),
        ],
        out_specs=row_spec(out_w),
        compiler_params=pltpu.CompilerParams(
            dimension_semantics=("parallel",),            # 2-TC sharding on v7x
            vmem_limit_bytes=vmem_limit),
        cost_estimate=cost,
    )(xk, epsk, kp["w1"], kp["b1"], kp["w2"], kp["b2"], kp["w3"], kp["b3"])

    z = packed[:B, :latent_dim]
    mu = packed[:B, latent_dim:2 * latent_dim]
    logvar = packed[:B, 2 * latent_dim:3 * latent_dim]
    return z, mu, logvar


# ----------------------------------------------------------------------------
# Demo / self-test
# ----------------------------------------------------------------------------
def _init_params(key, input_dim, first_layer_dim, second_layer_dim, latent_dim):
    """Deterministic PyTorch-style init: U(-1/sqrt(fan_in), 1/sqrt(fan_in)),
    stored in PyTorch layout (w: [out, in], b: [out])."""
    dims = {
        "1": (first_layer_dim, input_dim),
        "2": (second_layer_dim, first_layer_dim),
        "31": (latent_dim, second_layer_dim),
        "32": (latent_dim, second_layer_dim),
    }
    params = {}
    for name, (out_d, in_d) in dims.items():
        key, kw, kb = jax.random.split(key, 3)
        bound = 1.0 / (in_d ** 0.5)
        params[f"w{name}"] = jax.random.uniform(
            kw, (out_d, in_d), jnp.float32, -bound, bound)
        params[f"b{name}"] = jax.random.uniform(
            kb, (out_d,), jnp.float32, -bound, bound)
    return params


def _reference(x, eps, params):
    h1 = jnp.maximum(x @ params["w1"].T + params["b1"], 0.0)
    h2 = jnp.maximum(h1 @ params["w2"].T + params["b2"], 0.0)
    mu = h2 @ params["w31"].T + params["b31"]
    logvar = h2 @ params["w32"].T + params["b32"]
    z = mu + eps * jnp.exp(0.5 * logvar)
    return z, mu, logvar


if __name__ == "__main__":
    # Small shapes consistent with the module's fully-connected forward.
    batch = 16
    input_dim = 128
    first_layer_dim = 64
    second_layer_dim = 64
    latent_dim = 32

    key = jax.random.PRNGKey(0)
    k_params, k_x, k_eps = jax.random.split(key, 3)

    params = _init_params(k_params, input_dim, first_layer_dim,
                          second_layer_dim, latent_dim)

    x = jax.random.normal(k_x, (batch, input_dim), jnp.float32)
    # torch.randn_like(std) -> deterministic standard-normal noise passed in.
    eps = jax.random.normal(k_eps, (batch, latent_dim), jnp.float32)
    z_ref, mu_ref, logvar_ref = _reference(x, eps, params)

    # --- f32 path (tight reference check). block_b default is large; at this
    # tiny batch the tile picker still yields a 2-step grid (tb=8, grid=(2,)).
    kp_f32 = prepare_params(params, matmul_dtype=jnp.float32)
    z, mu, logvar = vae_forward(x, eps, kp_f32)
    jax.block_until_ready((z, mu, logvar))
    assert z.shape == (batch, latent_dim)
    assert mu.shape == (batch, latent_dim)
    assert logvar.shape == (batch, latent_dim)
    assert jnp.allclose(mu, mu_ref, atol=1e-5)
    assert jnp.allclose(logvar, logvar_ref, atol=1e-5)
    assert jnp.allclose(z, z_ref, atol=1e-5)

    # --- bf16-streamed path (recommended on v6e/v7x); looser tolerance.
    kp_bf16 = prepare_params(params, matmul_dtype=jnp.bfloat16)
    z_b, mu_b, logvar_b = vae_forward(x, eps, kp_bf16)
    jax.block_until_ready((z_b, mu_b, logvar_b))
    assert jnp.allclose(mu_b, mu_ref, atol=5e-2, rtol=5e-2)
    assert jnp.allclose(logvar_b, logvar_ref, atol=5e-2, rtol=5e-2)
    assert jnp.allclose(z_b, z_ref, atol=5e-2, rtol=5e-2)

    # --- ragged batch (B not a multiple of 8): exercises the zero-pad path,
    # valid rows must match exactly and no NaNs can arise from padded rows.
    b_odd = 12
    z_o, mu_o, logvar_o = vae_forward(x[:b_odd], eps[:b_odd], kp_f32)
    jax.block_until_ready((z_o, mu_o, logvar_o))
    assert z_o.shape == (b_odd, latent_dim)
    assert jnp.allclose(z_o, z_ref[:b_odd], atol=1e-5)
    assert jnp.all(jnp.isfinite(z_o))

    print("KERNEL_OK")
</pallas_src>

<mosaic_0001>
module attributes {stable_mosaic.version = 11 : i64} {
  func.func @_vae_fwd_kernel(%arg0: i32, %arg1: memref<8x128xf32, #tpu.memory_space<vmem>>, %arg2: memref<8x32xf32, #tpu.memory_space<vmem>>, %arg3: memref<128x128xf32, #tpu.memory_space<vmem>>, %arg4: memref<1x128xf32, #tpu.memory_space<vmem>>, %arg5: memref<128x128xf32, #tpu.memory_space<vmem>>, %arg6: memref<1x128xf32, #tpu.memory_space<vmem>>, %arg7: memref<128x64xf32, #tpu.memory_space<vmem>>, %arg8: memref<1x64xf32, #tpu.memory_space<vmem>>, %arg9: memref<8x128xf32, #tpu.memory_space<vmem>>) attributes {dimension_semantics = [#tpu.dimension_semantics<parallel>], iteration_bounds = array<i64: 2>, scalar_prefetch = 0 : i64, scratch_operands = 0 : i64, tpu.core_type = #tpu.core_type<tc>, window_params = [{transform_indices = @transform_0, window_bounds = array<i64: 8, 128>}, {transform_indices = @transform_1, window_bounds = array<i64: 8, 32>}, {pipeline_mode = #tpu.pipeline_mode<synchronous>, transform_indices = @transform_2, window_bounds = array<i64: 128, 128>}, {pipeline_mode = #tpu.pipeline_mode<synchronous>, transform_indices = @transform_3, window_bounds = array<i64: 1, 128>}, {pipeline_mode = #tpu.pipeline_mode<synchronous>, transform_indices = @transform_4, window_bounds = array<i64: 128, 128>}, {pipeline_mode = #tpu.pipeline_mode<synchronous>, transform_indices = @transform_5, window_bounds = array<i64: 1, 128>}, {pipeline_mode = #tpu.pipeline_mode<synchronous>, transform_indices = @transform_6, window_bounds = array<i64: 128, 64>}, {pipeline_mode = #tpu.pipeline_mode<synchronous>, transform_indices = @transform_7, window_bounds = array<i64: 1, 64>}, {transform_indices = @transform_8, window_bounds = array<i64: 8, 128>}]} {
    %c0 = arith.constant 0 : index
    %c0_0 = arith.constant 0 : index
    %0 = vector.load %arg1[%c0, %c0_0] : memref<8x128xf32, #tpu.memory_space<vmem>>, vector<8x128xf32>
    %c0_1 = arith.constant 0 : index
    %c0_2 = arith.constant 0 : index
    %1 = vector.load %arg3[%c0_1, %c0_2] : memref<128x128xf32, #tpu.memory_space<vmem>>, vector<128x128xf32>
    %cst = arith.constant dense<0.000000e+00> : vector<8x128xf32>
    %2 = tpu.matmul %0, %1, %cst {dimension_numbers = #tpu.dot_dimension_numbers<[1], [0], [0], [1], [0, 0, 1, 1], [], []>} : vector<8x128xf32>, vector<128x128xf32>, vector<8x128xf32> -> vector<8x128xf32>
    %c0_3 = arith.constant 0 : index
    %c0_4 = arith.constant 0 : index
    %3 = vector.load %arg4[%c0_3, %c0_4] : memref<1x128xf32, #tpu.memory_space<vmem>>, vector<1x128xf32>
    %4 = vector.broadcast %3 : vector<1x128xf32> to vector<8x128xf32>
    %5 = arith.addf %2, %4 : vector<8x128xf32>
    %cst_5 = arith.constant 0.000000e+00 : f32
    %6 = vector.broadcast %cst_5 : f32 to vector<8x128xf32>
    %7 = arith.maximumf %5, %6 : vector<8x128xf32>
    %c0_6 = arith.constant 0 : index
    %c0_7 = arith.constant 0 : index
    %8 = vector.load %arg5[%c0_6, %c0_7] : memref<128x128xf32, #tpu.memory_space<vmem>>, vector<128x128xf32>
    %cst_8 = arith.constant dense<0.000000e+00> : vector<8x128xf32>
    %9 = tpu.matmul %7, %8, %cst_8 {dimension_numbers = #tpu.dot_dimension_numbers<[1], [0], [0], [1], [0, 0, 1, 1], [], []>} : vector<8x128xf32>, vector<128x128xf32>, vector<8x128xf32> -> vector<8x128xf32>
    %c0_9 = arith.constant 0 : index
    %c0_10 = arith.constant 0 : index
    %10 = vector.load %arg6[%c0_9, %c0_10] : memref<1x128xf32, #tpu.memory_space<vmem>>, vector<1x128xf32>
    %11 = vector.broadcast %10 : vector<1x128xf32> to vector<8x128xf32>
    %12 = arith.addf %9, %11 : vector<8x128xf32>
    %cst_11 = arith.constant 0.000000e+00 : f32
    %13 = vector.broadcast %cst_11 : f32 to vector<8x128xf32>
    %14 = arith.maximumf %12, %13 : vector<8x128xf32>
    %c0_12 = arith.constant 0 : index
    %c0_13 = arith.constant 0 : index
    %15 = vector.load %arg7[%c0_12, %c0_13] : memref<128x64xf32, #tpu.memory_space<vmem>>, vector<128x64xf32>
    %cst_14 = arith.constant dense<0.000000e+00> : vector<8x64xf32>
    %16 = tpu.matmul %14, %15, %cst_14 {dimension_numbers = #tpu.dot_dimension_numbers<[1], [0], [0], [1], [0, 0, 1, 1], [], []>} : vector<8x128xf32>, vector<128x64xf32>, vector<8x64xf32> -> vector<8x64xf32>
    %c0_15 = arith.constant 0 : index
    %c0_16 = arith.constant 0 : index
    %17 = vector.load %arg8[%c0_15, %c0_16] : memref<1x64xf32, #tpu.memory_space<vmem>>, vector<1x64xf32>
    %18 = vector.broadcast %17 : vector<1x64xf32> to vector<8x64xf32>
    %19 = arith.addf %16, %18 : vector<8x64xf32>
    %20 = vector.extract_strided_slice %19 {offsets = [0, 0], sizes = [8, 32], strides = [1, 1]} : vector<8x64xf32> to vector<8x32xf32>
    %21 = vector.extract_strided_slice %19 {offsets = [0, 32], sizes = [8, 32], strides = [1, 1]} : vector<8x64xf32> to vector<8x32xf32>
    %c0_17 = arith.constant 0 : index
    %c0_18 = arith.constant 0 : index
    %22 = vector.load %arg2[%c0_17, %c0_18] : memref<8x32xf32, #tpu.memory_space<vmem>>, vector<8x32xf32>
    %cst_19 = arith.constant 5.000000e-01 : f32
    %23 = vector.broadcast %cst_19 : f32 to vector<8x32xf32>
    %24 = arith.mulf %23, %21 : vector<8x32xf32>
    %25 = math.exp %24 : vector<8x32xf32>
    %26 = arith.mulf %22, %25 : vector<8x32xf32>
    %27 = arith.addf %20, %26 : vector<8x32xf32>
    %c0_20 = arith.constant 0 : index
    %c0_21 = arith.constant 0 : index
    %28 = vector.load %arg9[%c0_20, %c0_21] : memref<8x128xf32, #tpu.memory_space<vmem>>, vector<8x32xf32>
    tpu.vector_store %arg9[%c0_20, %c0_21], %27 {strides = array<i32>} : memref<8x128xf32, #tpu.memory_space<vmem>>, vector<8x32xf32>,
    %c0_22 = arith.constant 0 : index
    %c32 = arith.constant 32 : index
    %29 = vector.load %arg9[%c0_22, %c32] : memref<8x128xf32, #tpu.memory_space<vmem>>, vector<8x64xf32>
    tpu.vector_store %arg9[%c0_22, %c32], %19 {strides = array<i32>} : memref<8x128xf32, #tpu.memory_space<vmem>>, vector<8x64xf32>,
    %cst_23 = arith.constant 0.000000e+00 : f32
    %30 = vector.broadcast %cst_23 : f32 to vector<8x32xf32>
    %c0_24 = arith.constant 0 : index
    %c96 = arith.constant 96 : index
    %31 = vector.load %arg9[%c0_24, %c96] : memref<8x128xf32, #tpu.memory_space<vmem>>, vector<8x32xf32>
    tpu.vector_store %arg9[%c0_24, %c96], %30 {strides = array<i32>} : memref<8x128xf32, #tpu.memory_space<vmem>>, vector<8x32xf32>,
    return
  }
  func.func @transform_0(%arg0: i32) -> (i32, i32) {
    %c0_i32 = arith.constant 0 : i32
    %c0_i32_0 = arith.constant 0 : i32
    return %arg0, %c0_i32 : i32, i32
  }
  func.func @transform_1(%arg0: i32) -> (i32, i32) {
    %c0_i32 = arith.constant 0 : i32
    %c0_i32_0 = arith.constant 0 : i32
    return %arg0, %c0_i32 : i32, i32
  }
  func.func @transform_2(%arg0: i32) -> (i32, i32) {
    %c0_i32 = arith.constant 0 : i32
    %c0_i32_0 = arith.constant 0 : i32
    %c0_i32_1 = arith.constant 0 : i32
    return %c0_i32, %c0_i32_0 : i32, i32
  }
  func.func @transform_3(%arg0: i32) -> (i32, i32) {
    %c0_i32 = arith.constant 0 : i32
    %c0_i32_0 = arith.constant 0 : i32
    %c0_i32_1 = arith.constant 0 : i32
    return %c0_i32, %c0_i32_0 : i32, i32
  }
  func.func @transform_4(%arg0: i32) -> (i32, i32) {
    %c0_i32 = arith.constant 0 : i32
    %c0_i32_0 = arith.constant 0 : i32
    %c0_i32_1 = arith.constant 0 : i32
    return %c0_i32, %c0_i32_0 : i32, i32
  }
  func.func @transform_5(%arg0: i32) -> (i32, i32) {
    %c0_i32 = arith.constant 0 : i32
    %c0_i32_0 = arith.constant 0 : i32
    %c0_i32_1 = arith.constant 0 : i32
    return %c0_i32, %c0_i32_0 : i32, i32
  }
  func.func @transform_6(%arg0: i32) -> (i32, i32) {
    %c0_i32 = arith.constant 0 : i32
    %c0_i32_0 = arith.constant 0 : i32
    %c0_i32_1 = arith.constant 0 : i32
    return %c0_i32, %c0_i32_0 : i32, i32
  }
  func.func @transform_7(%arg0: i32) -> (i32, i32) {
    %c0_i32 = arith.constant 0 : i32
    %c0_i32_0 = arith.constant 0 : i32
    %c0_i32_1 = arith.constant 0 : i32
    return %c0_i32, %c0_i32_0 : i32, i32
  }
  func.func @transform_8(%arg0: i32) -> (i32, i32) {
    %c0_i32 = arith.constant 0 : i32
    %c0_i32_0 = arith.constant 0 : i32
    return %arg0, %c0_i32 : i32, i32
  }
}

</mosaic_0001>

<llo_original>
// kernel: tpu_custom_call.1
$region0: #{tpu_custom_call.1}
  #allocation0 [shape = 'u32[]', space=smem, size = 0x4, offset = 0x4, fixed_abs, tag = 'smem constant byte address 0x4 - core index']
  #allocation1 [shape = 'u32[144,128]{1,0:T(1,128)}', space=vmem, size = 0x12000, scoped, tag = 'internal scratch']
  %s0 = inlined_call_operand.vmem [shape: f32[16,128], index: 0, kind: input, shape index: {}]
  %s1 = inlined_call_operand.vmem [shape: f32[16,32], index: 1, kind: input, shape index: {}]
  %s2 = inlined_call_operand.vmem [shape: f32[128,128], index: 2, kind: input, shape index: {}]
  %s3 = inlined_call_operand.vmem [shape: f32[1,128], index: 3, kind: input, shape index: {}]
  %s4 = inlined_call_operand.hbm [shape: f32[128,128], index: 4, kind: input, shape index: {}]
  %s5 = inlined_call_operand.vmem [shape: f32[1,128], index: 5, kind: input, shape index: {}]
  %s6 = inlined_call_operand.vmem [shape: f32[128,64], index: 6, kind: input, shape index: {}]
  %s7 = inlined_call_operand.vmem [shape: f32[1,64], index: 7, kind: input, shape index: {}]
  %s8 = inlined_call_operand.hbm [shape: f32[16,128], index: 8, kind: output, shape index: {}]
  %s9 = sld [smem:[#allocation0]]
  $region69: #{tpu_custom_call.1} parent=0
    _
  %s11 = ssub.s32 1, %s9
  %s12 = scalar_select 0, %s11, %s9
  $region1: #{tpu_custom_call.1} parent=0
    #allocation2 [shape = 'u8[65536]{0}', space=vmem, size = 0x10000, scoped, tag = 'input window, operand 4, single buffered']
    #allocation3 [shape = 's32[2]{0}', space=sflag, size = 0x8, scoped, tag = 'scoped memory for tpu_custom_call.1']
    #allocation4 [shape = 's32[2]{0}', space=sflag, size = 0x8, scoped, tag = 'scoped memory for tpu_custom_call.1']
    #allocation5 [shape = 'u8[8192]{0}', space=vmem, size = 0x2000, scoped, tag = 'output window, operand 0']
    %13 = vsyncpa [#allocation3], 0
    %14 = vsyncpa [#allocation4], 0
    %s15 = scalar_lea.sflag [#allocation4], 1
    %16 = vsyncpa %s15, 0
    loop: start=0, step=1, limit=4
    $region2: #{tpu_custom_call.1} parent=1 // loop_pre_header
      _
    $region3: #{tpu_custom_call.1} parent=1 // loop_header
      %s18 = sphi 0, %s22
      %p19 = scmp.ge.s32.totalorder %s18, 4
      %s28 = sphi 0, %s30
      %s31 = sphi 0, %s28
      %s32 = sphi 0, %s31
      %s48 = sphi 0, %s32
      %s54 = sphi 0, %s56
      %s57 = sphi 0, %s54
      %s58 = sphi 0, %s57
      %s74 = sphi 0, %s58
      %s78 = sphi 0, %s78
      %s80 = sphi 0, %s78
      %s81 = sphi 0, %s80
      %s95 = sphi 0, %s81
      %s99 = sphi 0, %s99
      %s101 = sphi 0, %s99
      %s102 = sphi 0, %s101
      %s116 = sphi 0, %s102
      %s120 = sphi 0, %s120
      %s122 = sphi 0, %s120
      %s123 = sphi 0, %s122
      %s137 = sphi 0, %s123
      %s141 = sphi 0, %s141
      %s143 = sphi 0, %s141
      %s144 = sphi 0, %s143
      %s158 = sphi 0, %s144
      %s162 = sphi 0, %s162
      %s164 = sphi 0, %s162
      %s165 = sphi 0, %s164
      %s179 = sphi 0, %s165
      %s183 = sphi 0, %s183
      %s185 = sphi 0, %s183
      %s186 = sphi 0, %s185
      %s200 = sphi 0, %s186
      %s206 = sphi 0, %s208
      %s209 = sphi 0, %s206
      %s210 = sphi 0, %s209
      %s226 = sphi 0, %s210
    $region4: #{tpu_custom_call.1} parent=1 // loop_header_branch
      %21 = sbr.rel (%p19) target = $region8
    $region5: #{tpu_custom_call.1} parent=1 // loop_body
      %s23 = ssub.s32 %s18, 1
      %s24 = ssub.s32 %s18, 2
      %s25 = sadd.s32 %s18, 1
      %s26 = ssub.s32 %s18, %s25
      %p27 = scmp.eq.s32.totalorder %s26, 0
      %s29 = sadd.s32 %s28, 1
      %s30 = scalar_select %p27, %s28, %s29
      %p33 = pneg %p27
      %p34 = scmp.eq.s32.totalorder %s18, 1
      %p35 = por %p33, %p34
      %p36 = scmp.ne.s32.totalorder %s28, %s31
      %p37 = scmp.eq.s32.totalorder %s18, 0
      %p38 = por %p36, %p37
      %p39 = scmp.ne.s32.totalorder %s28, %s31
      %p40 = scmp.eq.s32.totalorder %s23, 1
      %p41 = por %p39, %p40
      %p42 = scmp.ne.s32.totalorder %s31, %s32
      %p43 = scmp.eq.s32.totalorder %s23, 0
      %p44 = por %p42, %p43
      %p45 = scmp.ne.s32.totalorder %s31, %s32
      %p46 = scmp.eq.s32.totalorder %s24, 1
      %p47 = por %p45, %p46
      %p49 = scmp.ne.s32.totalorder %s32, %s48
      %p50 = scmp.eq.s32.totalorder %s24, 0
      %p51 = por %p49, %p50
      %s52 = ssub.s32 %s18, %s25
      %p53 = scmp.eq.s32.totalorder %s52, 0
      %s55 = sadd.s32 %s54, 1
      %s56 = scalar_select %p53, %s54, %s55
      %p59 = pneg %p53
      %p60 = scmp.eq.s32.totalorder %s18, 1
      %p61 = por %p59, %p60
      %p62 = scmp.ne.s32.totalorder %s54, %s57
      %p63 = scmp.eq.s32.totalorder %s18, 0
      %p64 = por %p62, %p63
      %p65 = scmp.ne.s32.totalorder %s54, %s57
      %p66 = scmp.eq.s32.totalorder %s23, 1
      %p67 = por %p65, %p66
      %p68 = scmp.ne.s32.totalorder %s57, %s58
      %p69 = scmp.eq.s32.totalorder %s23, 0
      %p70 = por %p68, %p69
      %p71 = scmp.ne.s32.totalorder %s57, %s58
      %p72 = scmp.eq.s32.totalorder %s24, 1
      %p73 = por %p71, %p72
      %p75 = scmp.ne.s32.totalorder %s58, %s74
      %p76 = scmp.eq.s32.totalorder %s24, 0
      %p77 = por %p75, %p76
      %s79 = sadd.s32 %s78, 1
      %p82 = scmp.eq.s32.totalorder %s18, 1
      %p83 = scmp.ne.s32.totalorder %s78, %s80
      %p84 = scmp.eq.s32.totalorder %s18, 0
      %p85 = por %p83, %p84
      %p86 = scmp.ne.s32.totalorder %s78, %s80
      %p87 = scmp.eq.s32.totalorder %s23, 1
      %p88 = por %p86, %p87
      %p89 = scmp.ne.s32.totalorder %s80, %s81
      %p90 = scmp.eq.s32.totalorder %s23, 0
      %p91 = por %p89, %p90
      %p92 = scmp.ne.s32.totalorder %s80, %s81
      %p93 = scmp.eq.s32.totalorder %s24, 1
      %p94 = por %p92, %p93
      %p96 = scmp.ne.s32.totalorder %s81, %s95
      %p97 = scmp.eq.s32.totalorder %s24, 0
      %p98 = por %p96, %p97
      %s100 = sadd.s32 %s99, 1
      %p103 = scmp.eq.s32.totalorder %s18, 1
      %p104 = scmp.ne.s32.totalorder %s99, %s101
      %p105 = scmp.eq.s32.totalorder %s18, 0
      %p106 = por %p104, %p105
      %p107 = scmp.ne.s32.totalorder %s99, %s101
      %p108 = scmp.eq.s32.totalorder %s23, 1
      %p109 = por %p107, %p108
      %p110 = scmp.ne.s32.totalorder %s101, %s102
      %p111 = scmp.eq.s32.totalorder %s23, 0
      %p112 = por %p110, %p111
      %p113 = scmp.ne.s32.totalorder %s101, %s102
      %p114 = scmp.eq.s32.totalorder %s24, 1
      %p115 = por %p113, %p114
      %p117 = scmp.ne.s32.totalorder %s102, %s116
      %p118 = scmp.eq.s32.totalorder %s24, 0
      %p119 = por %p117, %p118
      %s121 = sadd.s32 %s120, 1
      %p124 = scmp.eq.s32.totalorder %s18, 1
      %p125 = scmp.ne.s32.totalorder %s120, %s122
      %p126 = scmp.eq.s32.totalorder %s18, 0
      %p127 = por %p125, %p126
      %p128 = scmp.ne.s32.totalorder %s120, %s122
      %p129 = scmp.eq.s32.totalorder %s23, 1
      %p130 = por %p128, %p129
      %p131 = scmp.ne.s32.totalorder %s122, %s123
      %p132 = scmp.eq.s32.totalorder %s23, 0
      %p133 = por %p131, %p132
      %p134 = scmp.ne.s32.totalorder %s122, %s123
      %p135 = scmp.eq.s32.totalorder %s24, 1
      %p136 = por %p134, %p135
      %p138 = scmp.ne.s32.totalorder %s123, %s137
      %p139 = scmp.eq.s32.totalorder %s24, 0
      %p140 = por %p138, %p139
      %s142 = sadd.s32 %s141, 1
      %p145 = scmp.eq.s32.totalorder %s18, 1
      %p146 = scmp.ne.s32.totalorder %s141, %s143
      %p147 = scmp.eq.s32.totalorder %s18, 0
      %p148 = por %p146, %p147
      %p149 = scmp.ne.s32.totalorder %s141, %s143
      %p150 = scmp.eq.s32.totalorder %s23, 1
      %p151 = por %p149, %p150
      %p152 = scmp.ne.s32.totalorder %s143, %s144
      %p153 = scmp.eq.s32.totalorder %s23, 0
      %p154 = por %p152, %p153
      %p155 = scmp.ne.s32.totalorder %s143, %s144
      %p156 = scmp.eq.s32.totalorder %s24, 1
      %p157 = por %p155, %p156
      %p159 = scmp.ne.s32.totalorder %s144, %s158
      %p160 = scmp.eq.s32.totalorder %s24, 0
      %p161 = por %p159, %p160
      %s163 = sadd.s32 %s162, 1
      %p166 = scmp.eq.s32.totalorder %s18, 1
      %p167 = scmp.ne.s32.totalorder %s162, %s164
      %p168 = scmp.eq.s32.totalorder %s18, 0
      %p169 = por %p167, %p168
      %p170 = scmp.ne.s32.totalorder %s162, %s164
      %p171 = scmp.eq.s32.totalorder %s23, 1
      %p172 = por %p170, %p171
      %p173 = scmp.ne.s32.totalorder %s164, %s165
      %p174 = scmp.eq.s32.totalorder %s23, 0
      %p175 = por %p173, %p174
      %p176 = scmp.ne.s32.totalorder %s164, %s165
      %p177 = scmp.eq.s32.totalorder %s24, 1
      %p178 = por %p176, %p177
      %p180 = scmp.ne.s32.totalorder %s165, %s179
      %p181 = scmp.eq.s32.totalorder %s24, 0
      %p182 = por %p180, %p181
      %s184 = sadd.s32 %s183, 1
      %p187 = scmp.eq.s32.totalorder %s18, 1
      %p188 = scmp.ne.s32.totalorder %s183, %s185
      %p189 = scmp.eq.s32.totalorder %s18, 0
      %p190 = por %p188, %p189
      %p191 = scmp.ne.s32.totalorder %s183, %s185
      %p192 = scmp.eq.s32.totalorder %s23, 1
      %p193 = por %p191, %p192
      %p194 = scmp.ne.s32.totalorder %s185, %s186
      %p195 = scmp.eq.s32.totalorder %s23, 0
      %p196 = por %p194, %p195
      %p197 = scmp.ne.s32.totalorder %s185, %s186
      %p198 = scmp.eq.s32.totalorder %s24, 1
      %p199 = por %p197, %p198
      %p201 = scmp.ne.s32.totalorder %s186, %s200
      %p202 = scmp.eq.s32.totalorder %s24, 0
      %p203 = por %p201, %p202
      %s204 = ssub.s32 %s18, %s25
      %p205 = scmp.eq.s32.totalorder %s204, 0
      %s207 = sadd.s32 %s206, 1
      %s208 = scalar_select %p205, %s206, %s207
      %p211 = pneg %p205
      %p212 = scmp.eq.s32.totalorder %s18, 1
      %p213 = por %p211, %p212
      %p214 = scmp.ne.s32.totalorder %s206, %s209
      %p215 = scmp.eq.s32.totalorder %s18, 0
      %p216 = por %p214, %p215
      %p217 = scmp.ne.s32.totalorder %s206, %s209
      %p218 = scmp.eq.s32.totalorder %s23, 1
      %p219 = por %p217, %p218
      %p220 = scmp.ne.s32.totalorder %s209, %s210
      %p221 = scmp.eq.s32.totalorder %s23, 0
      %p222 = por %p220, %p221
      %p223 = scmp.ne.s32.totalorder %s209, %s210
      %p224 = scmp.eq.s32.totalorder %s24, 1
      %p225 = por %p223, %p224
      %p227 = scmp.ne.s32.totalorder %s210, %s226
      %p228 = scmp.eq.s32.totalorder %s24, 0
      %p229 = por %p227, %p228
      %p230 = scmp.le.s32.totalorder 1, %s18
      %p231 = scmp.lt.s32.totalorder %s18, 3
      %p232 = pnand %p230, %p231
      %p233 = pneg %p232
      // Predicated region
      $region9: #{tpu_custom_call.1} parent=5 // pred_check
        _
      $region10: #{tpu_custom_call.1} parent=5 // pred_check_branch
        %235 = sbr.rel (%p232) target = $region12
      $region11: #{tpu_custom_call.1} parent=5 // pred_region
        %s236 = ssub.s32 %s18, 1
        // Predicated region
        $region13: #{tpu_custom_call.1} parent=11 // pred_check
          %p237 = pneg %p91
        $region14: #{tpu_custom_call.1} parent=11 // pred_check_branch
          %239 = sbr.rel (%p237) target = $region16
        $region15: #{tpu_custom_call.1} parent=11 // pred_region
          _
        $region16: #{tpu_custom_call.1} parent=11 // pred_fallthru
          _
        // Predicated region
        $region17: #{tpu_custom_call.1} parent=11 // pred_check
          %p240 = pneg %p112
        $region18: #{tpu_custom_call.1} parent=11 // pred_check_branch
          %242 = sbr.rel (%p240) target = $region20
        $region19: #{tpu_custom_call.1} parent=11 // pred_region
          _
        $region20: #{tpu_custom_call.1} parent=11 // pred_fallthru
          _
        // Predicated region
        $region21: #{tpu_custom_call.1} parent=11 // pred_check
          %p243 = pneg %p133
        $region22: #{tpu_custom_call.1} parent=11 // pred_check_branch
          %245 = sbr.rel (%p243) target = $region24
        $region23: #{tpu_custom_call.1} parent=11 // pred_region
          %s247 = ssub.s32 2048, 2048
          %248 = vsyncadd [#allocation3], %s247
          %s249 = sshll.u32 [#allocation2], 4
          %s250 = int_to_ptr.vmem [resolvable:$true] %s249
          %255 = dma.hbm_to_vmem [thread:$0]  %s4, 2048, %s250, [#allocation3], 128, 128, 8
        $region24: #{tpu_custom_call.1} parent=11 // pred_fallthru
          _
        // Predicated region
        $region25: #{tpu_custom_call.1} parent=11 // pred_check
          %p256 = pneg %p154
        $region26: #{tpu_custom_call.1} parent=11 // pred_check_branch
          %258 = sbr.rel (%p256) target = $region28
        $region27: #{tpu_custom_call.1} parent=11 // pred_region
          _
        $region28: #{tpu_custom_call.1} parent=11 // pred_fallthru
          _
        // Predicated region
        $region29: #{tpu_custom_call.1} parent=11 // pred_check
          %p259 = pneg %p175
        $region30: #{tpu_custom_call.1} parent=11 // pred_check_branch
          %261 = sbr.rel (%p259) target = $region32
        $region31: #{tpu_custom_call.1} parent=11 // pred_region
          _
        $region32: #{tpu_custom_call.1} parent=11 // pred_fallthru
          _
        // Predicated region
        $region33: #{tpu_custom_call.1} parent=11 // pred_check
          %p262 = pneg %p196
        $region34: #{tpu_custom_call.1} parent=11 // pred_check_branch
          %264 = sbr.rel (%p262) target = $region36
        $region35: #{tpu_custom_call.1} parent=11 // pred_region
          _
        $region36: #{tpu_custom_call.1} parent=11 // pred_fallthru
          _
      $region12: #{tpu_custom_call.1} parent=5 // pred_fallthru
        _
      %p265 = scmp.lt.s32.totalorder %s18, 2
      // Predicated region
      $region37: #{tpu_custom_call.1} parent=5 // pred_check
        %p266 = pneg %p265
      $region38: #{tpu_custom_call.1} parent=5 // pred_check_branch
        %268 = sbr.rel (%p266) target = $region40
      $region39: #{tpu_custom_call.1} parent=5 // pred_region
        // Predicated region
        $region41: #{tpu_custom_call.1} parent=39 // pred_check
          %p269 = pneg %p38
        $region42: #{tpu_custom_call.1} parent=39 // pred_check_branch
          %271 = sbr.rel (%p269) target = $region44
        $region43: #{tpu_custom_call.1} parent=39 // pred_region
          %p272 = scmp.lt.s32.totalorder %s18, 1
          %s273 = scalar_select %p272, %s18, 1
          %s274 = smul.addr %s273, 8
          %s275 = scalar_lea.vmem %s0, %s274
        $region44: #{tpu_custom_call.1} parent=39 // pred_fallthru
          _
        // Predicated region
        $region45: #{tpu_custom_call.1} parent=39 // pred_check
          %p276 = pneg %p64
        $region46: #{tpu_custom_call.1} parent=39 // pred_check_branch
          %278 = sbr.rel (%p276) target = $region48
        $region47: #{tpu_custom_call.1} parent=39 // pred_region
          %p279 = scmp.lt.s32.totalorder %s18, 1
          %s280 = scalar_select %p279, %s18, 1
          %s281 = smul.addr %s280, 8
          %s282 = scalar_lea.vmem %s1, %s281
        $region48: #{tpu_custom_call.1} parent=39 // pred_fallthru
          _
      $region40: #{tpu_custom_call.1} parent=5 // pred_fallthru
        _
      %p283 = scmp.le.s32.totalorder 1, %s18
      %p284 = scmp.lt.s32.totalorder %s18, 3
      %p285 = pnand %p283, %p284
      %p286 = pneg %p285
      // Predicated region
      $region49: #{tpu_custom_call.1} parent=5 // pred_check
        _
      $region50: #{tpu_custom_call.1} parent=5 // pred_check_branch
        %288 = sbr.rel (%p285) target = $region52
      $region51: #{tpu_custom_call.1} parent=5 // pred_region
        %s289 = ssub.s32 %s18, 1
        // Predicated region
        $region53: #{tpu_custom_call.1} parent=51 // pred_check
          %p290 = pneg %p133
        $region54: #{tpu_custom_call.1} parent=51 // pred_check_branch
          %292 = sbr.rel (%p290) target = $region56
        $region55: #{tpu_custom_call.1} parent=51 // pred_region
          %293 = dma.done [#allocation3], 2048
        $region56: #{tpu_custom_call.1} parent=51 // pred_fallthru
          _
        %p294 = scmp.lt.s32.totalorder %s23, 1
        %s295 = scalar_select %p294, %s23, 1
        %s296 = smul.addr %s295, 8
        %s297 = scalar_lea.vmem %s0, %s296
        %p298 = pneg %p44
        %p299 = pneg %p41
        %p300 = scmp.lt.s32.totalorder %s23, 1
        %s301 = scalar_select %p300, %s23, 1
        %s302 = smul.addr %s301, 8
        %s303 = scalar_lea.vmem %s1, %s302
        %p304 = pneg %p70
        %p305 = pneg %p67
        %p306 = pneg %p91
        %p307 = pneg %p88
        %p308 = pneg %p112
        %p309 = pneg %p109
        %p310 = pneg %p133
        %p311 = pneg %p130
        %p312 = pneg %p154
        %p313 = pneg %p151
        %p314 = pneg %p175
        %p315 = pneg %p172
        %p316 = pneg %p196
        %p317 = pneg %p193
        %p318 = pneg %p222
        %p319 = pneg %p219
        %s320 = sand.u32 %s209, 1
        %s321 = scalar_lea.sflag [#allocation4], %s320
        %s322 = sand.u32 %s209, 1
        %s323 = smul.addr %s322, 8
        %s324 = scalar_lea.vmem [#allocation5], %s323
        %p325 = scmp.lt.s32.totalorder %s23, 1
        %s326 = scalar_select %p325, %s23, 1
        %s327 = smul.addr %s326, 8
        %s328 = scalar_lea.vmem %s0, %s327
        %p329 = scmp.lt.s32.totalorder %s23, 1
        %s330 = scalar_select %p329, %s23, 1
        %s331 = smul.addr %s330, 8
        %s332 = scalar_lea.vmem %s1, %s331
        %v333 = vld [vmem:[%s328] sm:$0xff]
        %v334 = vld [vmem:[%s2] sm:$0xff]
        %v335 = vld [vmem:[%s2 + $0x8] sm:$0xff]
        %v336 = vld [vmem:[%s2 + $0x10] sm:$0xff]
        %v337 = vld [vmem:[%s2 + $0x18] sm:$0xff]
        %v338 = vld [vmem:[%s2 + $0x20] sm:$0xff]
        %v339 = vld [vmem:[%s2 + $0x28] sm:$0xff]
        %v340 = vld [vmem:[%s2 + $0x30] sm:$0xff]
        %v341 = vld [vmem:[%s2 + $0x38] sm:$0xff]
        %v342 = vld [vmem:[%s2 + $0x40] sm:$0xff]
        %v343 = vld [vmem:[%s2 + $0x48] sm:$0xff]
        %v344 = vld [vmem:[%s2 + $0x50] sm:$0xff]
        %v345 = vld [vmem:[%s2 + $0x58] sm:$0xff]
        %v346 = vld [vmem:[%s2 + $0x60] sm:$0xff]
        %v347 = vld [vmem:[%s2 + $0x68] sm:$0xff]
        %v348 = vld [vmem:[%s2 + $0x70] sm:$0xff]
        %v349 = vld [vmem:[%s2 + $0x78] sm:$0xff]
        %v350 = vld [vmem:[%s3] sm:$0x1]
        %v352 = vlaneseq
        %v353 = vshrl.u32 %v352, 7
        %v354 = vsub.s32 0, %v353
        %v355 = vrot.slane %v350, %v354
        %357 = vmatprep.subr.mxu0 0.0
        %358 = vmatpush1.msra.mxu0 %v349
        %359 = vmatprep.subr.mxu0 0.0
        %360 = vmatpush1.msra.mxu0 %v348
        %361 = vmatprep.subr.mxu0 0.0
        %362 = vmatpush1.msra.mxu0 %v347
        %363 = vmatprep.subr.mxu0 0.0
        %364 = vmatpush1.msra.mxu0 %v346
        %365 = vmatprep.subr.mxu0 0.0
        %366 = vmatpush1.msra.mxu0 %v345
        %367 = vmatprep.subr.mxu0 0.0
        %368 = vmatpush1.msra.mxu0 %v344
        %369 = vmatprep.subr.mxu0 0.0
        %370 = vmatpush1.msra.mxu0 %v343
        %371 = vmatprep.subr.mxu0 0.0
        %372 = vmatpush1.msra.mxu0 %v342
        %373 = vmatprep.subr.mxu0 0.0
        %374 = vmatpush1.msra.mxu0 %v341
        %375 = vmatprep.subr.mxu0 0.0
        %376 = vmatpush1.msra.mxu0 %v340
        %377 = vmatprep.subr.mxu0 0.0
        %378 = vmatpush1.msra.mxu0 %v339
        %379 = vmatprep.subr.mxu0 0.0
        %380 = vmatpush1.msra.mxu0 %v338
        %381 = vmatprep.subr.mxu0 0.0
        %382 = vmatpush1.msra.mxu0 %v337
        %383 = vmatprep.subr.mxu0 0.0
        %384 = vmatpush1.msra.mxu0 %v336
        %385 = vmatprep.subr.mxu0 0.0
        %386 = vmatpush1.msra.mxu0 %v335
        %387 = vmatprep.subr.mxu0 0.0
        %388 = vmatpush1.msra.mxu0 %v334
        %389 = vmatprep.subr.mxu0 0.0
        %390 = vmatpush2.msra.mxu0 0.0
        %391 = vmatprep.subr.mxu0 0.0
        %392 = vmatpush2.msra.mxu0 0.0
        %393 = vmatprep.subr.mxu0 0.0
        %394 = vmatpush2.msra.mxu0 0.0
        %395 = vmatprep.subr.mxu0 0.0
        %396 = vmatpush2.msra.mxu0 0.0
        %397 = vmatprep.subr.mxu0 0.0
        %398 = vmatpush2.msra.mxu0 0.0
        %399 = vmatprep.subr.mxu0 0.0
        %400 = vmatpush2.msra.mxu0 0.0
        %401 = vmatprep.subr.mxu0 0.0
        %402 = vmatpush2.msra.mxu0 0.0
        %403 = vmatprep.subr.mxu0 0.0
        %404 = vmatpush2.msra.mxu0 0.0
        %405 = vmatprep.subr.mxu0 0.0
        %406 = vmatpush2.msra.mxu0 0.0
        %407 = vmatprep.subr.mxu0 0.0
        %408 = vmatpush2.msra.mxu0 0.0
        %409 = vmatprep.subr.mxu0 0.0
        %410 = vmatpush2.msra.mxu0 0.0
        %411 = vmatprep.subr.mxu0 0.0
        %412 = vmatpush2.msra.mxu0 0.0
        %413 = vmatprep.subr.mxu0 0.0
        %414 = vmatpush2.msra.mxu0 0.0
        %415 = vmatprep.subr.mxu0 0.0
        %416 = vmatpush2.msra.mxu0 0.0
        %417 = vmatprep.subr.mxu0 0.0
        %418 = vmatpush2.msra.mxu0 0.0
        %419 = vmatprep.subr.mxu0 0.0
        %420 = vmatpush2.msra.mxu0 0.0
        %421 = vmatprep.mubr.f32.mxu0 0.0
        %422 = vmatmul.mubr.f32.gmra.mxu0 %v333
        %v423 = vpop.f32.mrf.mxu0
        %v424 = vadd.f32 %v355, %v423
        %v425 = vpop.f32.mrf.mxu0
        %426 = vdwg.mxu0
        %v427 = vmax.f32 %v424, 0.0
        %v428 = vld [vmem:[#allocation2] sm:$0xff]
        %v429 = vld [vmem:[#allocation2 + $0x8] sm:$0xff]
        %v430 = vld [vmem:[#allocation2 + $0x10] sm:$0xff]
        %v431 = vld [vmem:[#allocation2 + $0x18] sm:$0xff]
        %v432 = vld [vmem:[#allocation2 + $0x20] sm:$0xff]
        %v433 = vld [vmem:[#allocation2 + $0x28] sm:$0xff]
        %v434 = vld [vmem:[#allocation2 + $0x30] sm:$0xff]
        %v435 = vld [vmem:[#allocation2 + $0x38] sm:$0xff]
        %v436 = vld [vmem:[#allocation2 + $0x40] sm:$0xff]
        %v437 = vld [vmem:[#allocation2 + $0x48] sm:$0xff]
        %v438 = vld [vmem:[#allocation2 + $0x50] sm:$0xff]
        %v439 = vld [vmem:[#allocation2 + $0x58] sm:$0xff]
        %v440 = vld [vmem:[#allocation2 + $0x60] sm:$0xff]
        %v441 = vld [vmem:[#allocation2 + $0x68] sm:$0xff]
        %v442 = vld [vmem:[#allocation2 + $0x70] sm:$0xff]
        %v443 = vld [vmem:[#allocation2 + $0x78] sm:$0xff]
        %v444 = vld [vmem:[%s5] sm:$0x1]
        %v446 = vlaneseq
        %v447 = vshrl.u32 %v446, 7
        %v448 = vsub.s32 0, %v447
        %v449 = vrot.slane %v444, %v448
        %451 = vmatprep.subr.mxu0 0.0
        %452 = vmatpush1.msra.mxu0 %v443
        %453 = vmatprep.subr.mxu0 0.0
        %454 = vmatpush1.msra.mxu0 %v442
        %455 = vmatprep.subr.mxu0 0.0
        %456 = vmatpush1.msra.mxu0 %v441
        %457 = vmatprep.subr.mxu0 0.0
        %458 = vmatpush1.msra.mxu0 %v440
        %459 = vmatprep.subr.mxu0 0.0
        %460 = vmatpush1.msra.mxu0 %v439
        %461 = vmatprep.subr.mxu0 0.0
        %462 = vmatpush1.msra.mxu0 %v438
        %463 = vmatprep.subr.mxu0 0.0
        %464 = vmatpush1.msra.mxu0 %v437
        %465 = vmatprep.subr.mxu0 0.0
        %466 = vmatpush1.msra.mxu0 %v436
        %467 = vmatprep.subr.mxu0 0.0
        %468 = vmatpush1.msra.mxu0 %v435
        %469 = vmatprep.subr.mxu0 0.0
        %470 = vmatpush1.msra.mxu0 %v434
        %471 = vmatprep.subr.mxu0 0.0
        %472 = vmatpush1.msra.mxu0 %v433
        %473 = vmatprep.subr.mxu0 0.0
        %474 = vmatpush1.msra.mxu0 %v432
        %475 = vmatprep.subr.mxu0 0.0
        %476 = vmatpush1.msra.mxu0 %v431
        %477 = vmatprep.subr.mxu0 0.0
        %478 = vmatpush1.msra.mxu0 %v430
        %479 = vmatprep.subr.mxu0 0.0
        %480 = vmatpush1.msra.mxu0 %v429
        %481 = vmatprep.subr.mxu0 0.0
        %482 = vmatpush1.msra.mxu0 %v428
        %483 = vmatprep.subr.mxu0 0.0
        %484 = vmatpush2.msra.mxu0 0.0
        %485 = vmatprep.subr.mxu0 0.0
        %486 = vmatpush2.msra.mxu0 0.0
        %487 = vmatprep.subr.mxu0 0.0
        %488 = vmatpush2.msra.mxu0 0.0
        %489 = vmatprep.subr.mxu0 0.0
        %490 = vmatpush2.msra.mxu0 0.0
        %491 = vmatprep.subr.mxu0 0.0
        %492 = vmatpush2.msra.mxu0 0.0
        %493 = vmatprep.subr.mxu0 0.0
        %494 = vmatpush2.msra.mxu0 0.0
        %495 = vmatprep.subr.mxu0 0.0
        %496 = vmatpush2.msra.mxu0 0.0
        %497 = vmatprep.subr.mxu0 0.0
        %498 = vmatpush2.msra.mxu0 0.0
        %499 = vmatprep.subr.mxu0 0.0
        %500 = vmatpush2.msra.mxu0 0.0
        %501 = vmatprep.subr.mxu0 0.0
        %502 = vmatpush2.msra.mxu0 0.0
        %503 = vmatprep.subr.mxu0 0.0
        %504 = vmatpush2.msra.mxu0 0.0
        %505 = vmatprep.subr.mxu0 0.0
        %506 = vmatpush2.msra.mxu0 0.0
        %507 = vmatprep.subr.mxu0 0.0
        %508 = vmatpush2.msra.mxu0 0.0
        %509 = vmatprep.subr.mxu0 0.0
        %510 = vmatpush2.msra.mxu0 0.0
        %511 = vmatprep.subr.mxu0 0.0
        %512 = vmatpush2.msra.mxu0 0.0
        %513 = vmatprep.subr.mxu0 0.0
        %514 = vmatpush2.msra.mxu0 0.0
        %515 = vmatprep.mubr.f32.mxu0 0.0
        %516 = vmatmul.mubr.f32.gmra.mxu0 %v427
        %v517 = vpop.f32.mrf.mxu0
        %v518 = vadd.f32 %v449, %v517
        %v519 = vpop.f32.mrf.mxu0
        %520 = vdwg.mxu0
        %v521 = vmax.f32 %v518, 0.0
        %v522 = vld [vmem:[%s6] sm:$0xff]
        %v523 = vld [vmem:[%s6 + $0x8] sm:$0xff]
        %v524 = vld [vmem:[%s6 + $0x10] sm:$0xff]
        %v525 = vld [vmem:[%s6 + $0x18] sm:$0xff]
        %v526 = vld [vmem:[%s6 + $0x20] sm:$0xff]
        %v527 = vld [vmem:[%s6 + $0x28] sm:$0xff]
        %v528 = vld [vmem:[%s6 + $0x30] sm:$0xff]
        %v529 = vld [vmem:[%s6 + $0x38] sm:$0xff]
        %v530 = vld [vmem:[%s6 + $0x40] sm:$0xff]
        %v531 = vld [vmem:[%s6 + $0x48] sm:$0xff]
        %v532 = vld [vmem:[%s6 + $0x50] sm:$0xff]
        %v533 = vld [vmem:[%s6 + $0x58] sm:$0xff]
        %v534 = vld [vmem:[%s6 + $0x60] sm:$0xff]
        %v535 = vld [vmem:[%s6 + $0x68] sm:$0xff]
        %v536 = vld [vmem:[%s6 + $0x70] sm:$0xff]
        %v537 = vld [vmem:[%s6 + $0x78] sm:$0xff]
        %v538 = vld [vmem:[%s7] sm:$0x1]
        %v540 = vlaneseq
        %v541 = vshrl.u32 %v540, 7
        %v542 = vsub.s32 0, %v541
        %v543 = vrot.slane %v538, %v542
        %545 = vmatprep.subr.mxu0 0.0
        %546 = vmatpush1.msra.mxu0 %v537
        %547 = vmatprep.subr.mxu0 0.0
        %548 = vmatpush1.msra.mxu0 %v536
        %549 = vmatprep.subr.mxu0 0.0
        %550 = vmatpush1.msra.mxu0 %v535
        %551 = vmatprep.subr.mxu0 0.0
        %552 = vmatpush1.msra.mxu0 %v534
        %553 = vmatprep.subr.mxu0 0.0
        %554 = vmatpush1.msra.mxu0 %v533
        %555 = vmatprep.subr.mxu0 0.0
        %556 = vmatpush1.msra.mxu0 %v532
        %557 = vmatprep.subr.mxu0 0.0
        %558 = vmatpush1.msra.mxu0 %v531
        %559 = vmatprep.subr.mxu0 0.0
        %560 = vmatpush1.msra.mxu0 %v530
        %561 = vmatprep.subr.mxu0 0.0
        %562 = vmatpush1.msra.mxu0 %v529
        %563 = vmatprep.subr.mxu0 0.0
        %564 = vmatpush1.msra.mxu0 %v528
        %565 = vmatprep.subr.mxu0 0.0
        %566 = vmatpush1.msra.mxu0 %v527
        %567 = vmatprep.subr.mxu0 0.0
        %568 = vmatpush1.msra.mxu0 %v526
        %569 = vmatprep.subr.mxu0 0.0
        %570 = vmatpush1.msra.mxu0 %v525
        %571 = vmatprep.subr.mxu0 0.0
        %572 = vmatpush1.msra.mxu0 %v524
        %573 = vmatprep.subr.mxu0 0.0
        %574 = vmatpush1.msra.mxu0 %v523
        %575 = vmatprep.subr.mxu0 0.0
        %576 = vmatpush1.msra.mxu0 %v522
        %577 = vmatprep.subr.mxu0 0.0
        %578 = vmatpush2.msra.mxu0 0.0
        %579 = vmatprep.subr.mxu0 0.0
        %580 = vmatpush2.msra.mxu0 0.0
        %581 = vmatprep.subr.mxu0 0.0
        %582 = vmatpush2.msra.mxu0 0.0
        %583 = vmatprep.subr.mxu0 0.0
        %584 = vmatpush2.msra.mxu0 0.0
        %585 = vmatprep.subr.mxu0 0.0
        %586 = vmatpush2.msra.mxu0 0.0
        %587 = vmatprep.subr.mxu0 0.0
        %588 = vmatpush2.msra.mxu0 0.0
        %589 = vmatprep.subr.mxu0 0.0
        %590 = vmatpush2.msra.mxu0 0.0
        %591 = vmatprep.subr.mxu0 0.0
        %592 = vmatpush2.msra.mxu0 0.0
        %593 = vmatprep.subr.mxu0 0.0
        %594 = vmatpush2.msra.mxu0 0.0
        %595 = vmatprep.subr.mxu0 0.0
        %596 = vmatpush2.msra.mxu0 0.0
        %597 = vmatprep.subr.mxu0 0.0
        %598 = vmatpush2.msra.mxu0 0.0
        %599 = vmatprep.subr.mxu0 0.0
        %600 = vmatpush2.msra.mxu0 0.0
        %601 = vmatprep.subr.mxu0 0.0
        %602 = vmatpush2.msra.mxu0 0.0
        %603 = vmatprep.subr.mxu0 0.0
        %604 = vmatpush2.msra.mxu0 0.0
        %605 = vmatprep.subr.mxu0 0.0
        %606 = vmatpush2.msra.mxu0 0.0
        %607 = vmatprep.subr.mxu0 0.0
        %608 = vmatpush2.msra.mxu0 0.0
        %609 = vmatprep.mubr.f32.mxu0 0.0
        %610 = vmatmul.mubr.f32.gmra.mxu0 %v521
        %v611 = vpop.f32.mrf.mxu0
        %v612 = vadd.f32 %v543, %v611
        %v613 = vpop.f32.mrf.mxu0
        %614 = vdwg.mxu0
        %v615 = vld [vmem:[%s332] sm:$0xff]
        %v616 = vmul.f32 %v612, 0.5
        %v617 = vmul.f32 %v616, 1.442695
        %v618 = vpow.pop %v617
        %620 = vrot.lane.b32.xlu0 %v618, 96
        %v621 = vpop.permute.xlu0 %620
        %v623 = vmul.f32 %v615, %v621
        %v624 = vadd.f32 %v612, %v623
        %vm625 = vcmask 261120
        %626 = vst.msk [vmem:[%s324] sm:$0xff] %vm625, %v624
        %628 = vrot.lane.b32.xlu0 %v612, 32
        %v629 = vpop.permute.xlu0 %628
        %vm631 = vcmask 785664
        %632 = vst.msk [vmem:[%s324] sm:$0xff] %vm631, %v629
        %vm633 = vcmask 1048320
        %634 = vst.msk [vmem:[%s324] sm:$0xff] %vm633, 0.0
        %s635 = sand.u32 %s209, 1
        %s636 = scalar_lea.sflag [#allocation4], %s635
        %s637 = sand.u32 %s209, 1
        %s638 = smul.addr %s637, 8
        %s639 = scalar_lea.vmem [#allocation5], %s638
        // Predicated region
        $region57: #{tpu_custom_call.1} parent=51 // pred_check
          %p640 = pneg %p219
        $region58: #{tpu_custom_call.1} parent=51 // pred_check_branch
          %642 = sbr.rel (%p640) target = $region60
        $region59: #{tpu_custom_call.1} parent=51 // pred_region
          %s644 = ssub.s32 128, 128
          %645 = vsyncadd %s636, %s644
          %s646 = smul.addr %s23, 128
          %s647 = scalar_lea.hbm %s8, %s646
          %s649 = sshll.u32 %s639, 4
          %s650 = int_to_ptr.vmem [resolvable:$true] %s649
          %652 = dma.vmem_to_hbm [thread:$0]  %s650, 128, %s647, %s636
        $region60: #{tpu_custom_call.1} parent=51 // pred_fallthru
          _
      $region52: #{tpu_custom_call.1} parent=5 // pred_fallthru
        _
      %p653 = scmp.le.s32.totalorder 2, %s18
      // Predicated region
      $region61: #{tpu_custom_call.1} parent=5 // pred_check
        %p654 = pneg %p653
      $region62: #{tpu_custom_call.1} parent=5 // pred_check_branch
        %656 = sbr.rel (%p654) target = $region64
      $region63: #{tpu_custom_call.1} parent=5 // pred_region
        %s657 = ssub.s32 %s18, 2
        // Predicated region
        $region65: #{tpu_custom_call.1} parent=63 // pred_check
          %p658 = pneg %p225
        $region66: #{tpu_custom_call.1} parent=63 // pred_check_branch
          %660 = sbr.rel (%p658) target = $region68
        $region67: #{tpu_custom_call.1} parent=63 // pred_region
          %s661 = sand.u32 %s210, 1
          %s662 = scalar_lea.sflag [#allocation4], %s661
          %s663 = sand.u32 %s210, 1
          %s664 = smul.addr %s663, 8
          %s665 = scalar_lea.vmem [#allocation5], %s664
          %666 = dma.done %s662, 128
        $region68: #{tpu_custom_call.1} parent=63 // pred_fallthru
          _
      $region64: #{tpu_custom_call.1} parent=5 // pred_fallthru
        _
    $region6: #{tpu_custom_call.1} parent=1 // loop_footer
      %s22 = sadd.s32 1, %s18
    $region7: #{tpu_custom_call.1} parent=1 // loop_footer_branch
      %17 = sbr.rel target = $region3
    $region8: #{tpu_custom_call.1} parent=1 // loop_exit
      _
    %667 = vsyncpa [#allocation3], 1
    %s668 = scalar_lea.sflag [#allocation3], 1
    %669 = vsyncpa %s668, 1
    %670 = vsyncpa [#allocation4], 1
    %s671 = scalar_lea.sflag [#allocation4], 1
    %672 = vsyncpa %s671, 1

</llo_original>
